<compile_context>
chip_gen: v7x
topology: tpu7x:2x2x1
jax: 0.10.0
libtpu: 0.0.40
codegen_flags: <defaults>
</compile_context>

<pallas_src>
import functools

import numpy as np

import jax
import jax.numpy as jnp
from jax.experimental import pallas as pl
from jax.experimental.pallas import tpu as pltpu


# Conservative per-kernel tile working-set budget: fits v7x's 32 MiB scoped-VMEM default
# (64 MiB physical) with headroom; v5e/v6e (128 MiB physical) are strictly easier.
_VMEM_TILE_BUDGET = 12 * 1024 * 1024
_MAX_ROW_TILE = 2048
_VMEM_LIMIT_BYTES = 32 * 1024 * 1024


def _pick_row_tile(rows, bytes_per_row, budget=_VMEM_TILE_BUDGET, cap=_MAX_ROW_TILE):
    """Largest multiple-of-8 row tile whose double-buffered slabs fit `budget`.

    Big tiles amortize the ~0.35 us per-grid-step pipeline overhead; the cap keeps a tile
    within the per-generation scoped-VMEM limit (32 MiB default on v7x)."""
    if rows <= 8:
        return int(rows)                      # single full block for tiny inputs
    tm = (budget // max(int(bytes_per_row), 1)) // 8 * 8
    return int(max(8, min(tm, cap, (rows // 8) * 8)))


# --------------------------------------------------------------------------------------
# Kernel 1: packed per-head QKV projections  (split_qkv_packed, non-partitioned case)
# --------------------------------------------------------------------------------------
def _qkv_proj_kernel(x_ref, wq_ref, wk_ref, wv_ref, q_ref, k_ref, v_ref):
    x = x_ref[...].astype(jnp.float32)                       # (tr, d_model)
    q_ref[0] = jnp.dot(x, wq_ref[0].astype(jnp.float32),
                       preferred_element_type=jnp.float32).astype(q_ref.dtype)
    k_ref[0] = jnp.dot(x, wk_ref[0].astype(jnp.float32),
                       preferred_element_type=jnp.float32).astype(k_ref.dtype)
    v_ref[0] = jnp.dot(x, wv_ref[0].astype(jnp.float32),
                       preferred_element_type=jnp.float32).astype(v_ref.dtype)


def _qkv_projection(inp, w_qs, w_ks, w_vs):
    T, d_model = inp.shape
    n_head, _, d_k = w_qs.shape
    d_v = w_vs.shape[-1]
    bytes_per_row = 2 * 4 * (d_model + 2 * d_k + d_v)        # double-buffered f32 in/out
    tr = _pick_row_tile(T, bytes_per_row)
    grid = (n_head, pl.cdiv(T, tr))
    return pl.pallas_call(
        _qkv_proj_kernel,
        out_shape=(
            jax.ShapeDtypeStruct((n_head, T, d_k), inp.dtype),
            jax.ShapeDtypeStruct((n_head, T, d_k), inp.dtype),
            jax.ShapeDtypeStruct((n_head, T, d_v), inp.dtype),
        ),
        grid_spec=pltpu.PrefetchScalarGridSpec(
            num_scalar_prefetch=0,
            grid=grid,
            in_specs=[
                pl.BlockSpec((tr, d_model), lambda h, r: (r, 0)),
                pl.BlockSpec((1, d_model, d_k), lambda h, r: (h, 0, 0)),
                pl.BlockSpec((1, d_model, d_k), lambda h, r: (h, 0, 0)),
                pl.BlockSpec((1, d_model, d_v), lambda h, r: (h, 0, 0)),
            ],
            out_specs=(
                pl.BlockSpec((1, tr, d_k), lambda h, r: (h, r, 0)),
                pl.BlockSpec((1, tr, d_k), lambda h, r: (h, r, 0)),
                pl.BlockSpec((1, tr, d_v), lambda h, r: (h, r, 0)),
            ),
        ),
        compiler_params=pltpu.CompilerParams(
            dimension_semantics=("parallel", "parallel"),
            vmem_limit_bytes=_VMEM_LIMIT_BYTES,
        ),
    )(inp, w_qs, w_ks, w_vs)


# --------------------------------------------------------------------------------------
# Kernel 2: ScaledDotProductAttention per (head, batch) with key-padding mask
# --------------------------------------------------------------------------------------
def _attention_kernel(q_ref, k_ref, v_ref, valid_ref, o_ref, attn_ref, *, inv_temper):
    q = q_ref[0, 0].astype(jnp.float32)                      # (L, d_k)
    k = k_ref[0, 0].astype(jnp.float32)                      # (L, d_k)
    v = v_ref[0, 0].astype(jnp.float32)                      # (L, d_v)
    valid = valid_ref[0].astype(jnp.float32)                 # (1, L): 1.0 valid key, 0.0 pad

    # attn = q @ k^T / temper   (NT matmul; contraction over d_k, no explicit transpose)
    s = jax.lax.dot_general(q, k, (((1,), (1,)), ((), ())),
                            preferred_element_type=jnp.float32) * inv_temper
    # masked_fill(attn_mask, -inf): mask depends on the key position only.
    s = s + (valid - 1.0) * jnp.float32(1e30)

    m = jnp.max(s, axis=-1, keepdims=True)
    p = jnp.exp(s - m)
    l = jnp.sum(p, axis=-1, keepdims=True)
    inv = pl.reciprocal(l, approx=True)                      # EUP slot
    inv = inv * (2.0 - l * inv)                              # one Newton step -> ~f32 accuracy
    attn = p * inv

    attn_ref[0, 0] = attn.astype(attn_ref.dtype)
    o_ref[0, 0] = jnp.dot(attn, v,
                          preferred_element_type=jnp.float32).astype(o_ref.dtype)


def _attention(q_p, k_p, v_p, key_valid, *, temper):
    n_head, mb, L, d_k = q_p.shape
    d_v = v_p.shape[-1]
    kernel = functools.partial(_attention_kernel, inv_temper=float(1.0 / temper))
    return pl.pallas_call(
        kernel,
        out_shape=(
            jax.ShapeDtypeStruct((n_head, mb, L, d_v), q_p.dtype),
            jax.ShapeDtypeStruct((n_head, mb, L, L), q_p.dtype),
        ),
        grid_spec=pltpu.PrefetchScalarGridSpec(
            num_scalar_prefetch=0,
            grid=(n_head, mb),
            in_specs=[
                pl.BlockSpec((1, 1, L, d_k), lambda h, b: (h, b, 0, 0)),
                pl.BlockSpec((1, 1, L, d_k), lambda h, b: (h, b, 0, 0)),
                pl.BlockSpec((1, 1, L, d_v), lambda h, b: (h, b, 0, 0)),
                pl.BlockSpec((1, 1, L), lambda h, b: (b, 0, 0)),
            ],
            out_specs=(
                pl.BlockSpec((1, 1, L, d_v), lambda h, b: (h, b, 0, 0)),
                pl.BlockSpec((1, 1, L, L), lambda h, b: (h, b, 0, 0)),
            ),
        ),
        compiler_params=pltpu.CompilerParams(
            dimension_semantics=("parallel", "parallel"),
            vmem_limit_bytes=_VMEM_LIMIT_BYTES,
        ),
    )(q_p, k_p, v_p, key_valid)


# --------------------------------------------------------------------------------------
# Kernel 3: fused output projection + residual add + benepar LayerNormalization
# --------------------------------------------------------------------------------------
def _proj_residual_layernorm_kernel(x_ref, w_ref, res_ref, a_ref, b_ref, o_ref, *, eps):
    x = x_ref[...].astype(jnp.float32)                       # (tm, H)   combined head outputs
    w = w_ref[...].astype(jnp.float32)                       # (d_model, H)  nn.Linear weight
    # proj(x) = x @ w.T  (contract both last dims -> NT matmul, no explicit transpose)
    y = jax.lax.dot_general(x, w, (((1,), (1,)), ((), ())),
                            preferred_element_type=jnp.float32)
    y = y + res_ref[...].astype(jnp.float32)                 # residual add

    d = y.shape[-1]
    # Stable two-pass statistics on the VMEM-resident tile (kernel is HBM-bound anyway).
    mu = jnp.mean(y, axis=-1, keepdims=True)
    diff = y - mu
    var = jnp.sum(diff * diff, axis=-1, keepdims=True) * (1.0 / (d - 1))  # torch.std: unbiased
    denom = jnp.sqrt(var) + jnp.float32(eps)                 # eps added to sigma (benepar)
    inv = pl.reciprocal(denom, approx=True)                  # EUP slot, not VALU divide
    inv = inv * (2.0 - denom * inv)                          # Newton step -> ~full f32 accuracy
    out = diff * (inv * a_ref[...].astype(jnp.float32)) + b_ref[...].astype(jnp.float32)
    o_ref[...] = out.astype(o_ref.dtype)


def _proj_residual_layernorm(combined, proj_weight, residual, a_2, b_2, *, eps):
    T, H = combined.shape
    d_model = residual.shape[-1]
    if d_model == 1:
        # LayerNormalization returns its input unchanged when the last dim is 1.
        return jnp.dot(combined, proj_weight.T) + residual

    bytes_per_row = 2 * 4 * (H + 2 * d_model)                # double-buffered f32 in/out
    tm = _pick_row_tile(T, bytes_per_row)
    grid = (pl.cdiv(T, tm),)                                  # ragged last block, no wrapper pad

    a2d = a_2.reshape(1, d_model).astype(jnp.float32)
    b2d = b_2.reshape(1, d_model).astype(jnp.float32)

    cost = pl.CostEstimate(
        flops=2 * T * H * d_model + 10 * T * d_model,
        transcendentals=2 * T,
        bytes_accessed=4 * (T * H + 2 * T * d_model + d_model * H + 2 * d_model),
    )
    return pl.pallas_call(
        functools.partial(_proj_residual_layernorm_kernel, eps=float(eps)),
        out_shape=jax.ShapeDtypeStruct((T, d_model), residual.dtype),
        grid_spec=pltpu.PrefetchScalarGridSpec(
            num_scalar_prefetch=0,
            grid=grid,
            in_specs=[
                pl.BlockSpec((tm, H), lambda i: (i, 0)),
                pl.BlockSpec((d_model, H), lambda i: (0, 0)),
                pl.BlockSpec((tm, d_model), lambda i: (i, 0)),
                pl.BlockSpec((1, d_model), lambda i: (0, 0)),
                pl.BlockSpec((1, d_model), lambda i: (0, 0)),
            ],
            out_specs=pl.BlockSpec((tm, d_model), lambda i: (i, 0)),
        ),
        compiler_params=pltpu.CompilerParams(
            dimension_semantics=("parallel",),
            vmem_limit_bytes=_VMEM_LIMIT_BYTES,
        ),
        cost_estimate=cost,
    )(combined, proj_weight, residual, a2d, b2d)


# --------------------------------------------------------------------------------------
# Full MultiHeadAttention forward (non-partitioned, eval-mode dropout = identity)
# --------------------------------------------------------------------------------------
def multi_head_attention(inp, lengths, w_qs, w_ks, w_vs, proj_weight, a_2, b_2, *, eps=1e-3):
    """inp: (T, d_model) packed tokens; lengths: static per-batch sequence lengths."""
    T, d_model = inp.shape
    n_head, _, d_k = w_qs.shape
    d_v = w_vs.shape[-1]
    lengths = [int(l) for l in lengths]
    assert sum(lengths) == T
    mb, L = len(lengths), max(lengths)                       # batch_size, max_len

    # 1. packed per-head QKV projections (Pallas).
    q_s, k_s, v_s = _qkv_projection(inp, w_qs, w_ks, w_vs)

    # 2. pad_and_rearrange: static packed->padded gather (layout plumbing, host-built indices).
    pos = np.zeros((mb, L), np.int32)
    valid = np.zeros((mb, L), np.float32)
    off = 0
    for b, ln in enumerate(lengths):
        pos[b, :ln] = off + np.arange(ln, dtype=np.int32)
        valid[b, :ln] = 1.0
        off += ln
    pos_j = jnp.asarray(pos.reshape(-1))
    valid_j = jnp.asarray(valid)

    def pad(x):
        g = jnp.take(x, pos_j, axis=1).reshape(n_head, mb, L, x.shape[-1])
        return g * valid_j[None, :, :, None]                 # zero the padded rows

    q_p, k_p, v_p = pad(q_s), pad(k_s), pad(v_s)
    key_valid = jnp.asarray(valid).reshape(mb, 1, L)

    # 3. scaled dot-product attention with key-padding mask (Pallas).
    # TODO(synk): attention dropout not implemented (inference / eval() semantics: identity).
    out_p, attn_p = _attention(q_p, k_p, v_p, key_valid, temper=float(d_model) ** 0.5)

    # 4. un-pad (outputs_padded[output_mask]) + combine_v layout plumbing.
    flat_idx = []
    for b, ln in enumerate(lengths):
        flat_idx.extend(b * L + p for p in range(ln))
    flat_idx = jnp.asarray(np.asarray(flat_idx, np.int32))
    outputs = jnp.take(out_p.reshape(n_head, mb * L, d_v), flat_idx, axis=1)   # (n_head, T, d_v)
    combined = jnp.transpose(outputs, (1, 0, 2)).reshape(T, n_head * d_v)

    # 5. fused proj + residual add + LayerNormalization (Pallas).
    # TODO(synk): residual FeatureDropout not implemented (inference / eval() semantics).
    out = _proj_residual_layernorm(combined, proj_weight, inp, a_2, b_2, eps=eps)

    attns_padded = attn_p.reshape(n_head * mb, L, L)
    return out, attns_padded


# --------------------------------------------------------------------------------------
# Pure-JAX reference mirroring the PyTorch module (eval mode)
# --------------------------------------------------------------------------------------
def _reference(inp, lengths, w_qs, w_ks, w_vs, proj_weight, a_2, b_2, eps=1e-3):
    hi = jax.lax.Precision.HIGHEST
    T, d_model = inp.shape
    n_head, _, d_k = w_qs.shape
    d_v = w_vs.shape[-1]
    mb, L = len(lengths), max(lengths)
    temper = float(d_model) ** 0.5

    q_s = jnp.einsum("td,hdk->htk", inp, w_qs, precision=hi)
    k_s = jnp.einsum("td,hdk->htk", inp, w_ks, precision=hi)
    v_s = jnp.einsum("td,hdk->htk", inp, w_vs, precision=hi)

    def pad(x):
        xp = jnp.zeros((n_head, mb, L, x.shape[-1]), x.dtype)
        off = 0
        for b, ln in enumerate(lengths):
            xp = xp.at[:, b, :ln, :].set(x[:, off:off + ln, :])
            off += ln
        return xp

    q_p, k_p, v_p = pad(q_s), pad(k_s), pad(v_s)
    invalid = np.ones((mb, L), dtype=bool)
    for b, ln in enumerate(lengths):
        invalid[b, :ln] = False
    invalid = jnp.asarray(invalid)

    s = jnp.einsum("hbqd,hbkd->hbqk", q_p, k_p, precision=hi) / temper
    s = jnp.where(invalid[None, :, None, :], -jnp.inf, s)
    attn = jax.nn.softmax(s, axis=-1)
    out_p = jnp.einsum("hbqk,hbkd->hbqd", attn, v_p, precision=hi)

    chunks = [out_p[:, b, :ln, :] for b, ln in enumerate(lengths)]
    outputs = jnp.concatenate(chunks, axis=1)                # (n_head, T, d_v)
    combined = jnp.transpose(outputs, (1, 0, 2)).reshape(T, n_head * d_v)
    y = jnp.dot(combined, proj_weight.T, precision=hi) + inp

    mu = jnp.mean(y, axis=-1, keepdims=True)
    var = jnp.sum((y - mu) ** 2, axis=-1, keepdims=True) / (d_model - 1)   # unbiased (torch.std)
    ln_out = (y - mu) / (jnp.sqrt(var) + eps) * a_2 + b_2
    return ln_out, attn.reshape(n_head * mb, L, L)


if __name__ == "__main__":
    key = jax.random.PRNGKey(0)
    n_head, d_model, d_k, d_v = 2, 32, 8, 8
    lengths = [5, 8]                       # packed sequences (batch_idxs): batch of 2, max_len 8
    T = sum(lengths)

    ks = jax.random.split(key, 5)
    inp = jax.random.normal(ks[0], (T, d_model), jnp.float32)
    xav_qk = (2.0 / (d_model + d_k)) ** 0.5
    xav_v = (2.0 / (d_model + d_v)) ** 0.5
    w_qs = xav_qk * jax.random.normal(ks[1], (n_head, d_model, d_k), jnp.float32)
    w_ks = xav_qk * jax.random.normal(ks[2], (n_head, d_model, d_k), jnp.float32)
    w_vs = xav_v * jax.random.normal(ks[3], (n_head, d_model, d_v), jnp.float32)
    proj_w = (1.0 / (n_head * d_v)) ** 0.5 * jax.random.normal(
        ks[4], (d_model, n_head * d_v), jnp.float32)
    a_2 = jnp.ones((d_model,), jnp.float32)
    b_2 = jnp.zeros((d_model,), jnp.float32)

    out, attns = multi_head_attention(inp, lengths, w_qs, w_ks, w_vs, proj_w, a_2, b_2, eps=1e-3)
    out, attns = jax.block_until_ready((out, attns))

    ref_out, ref_attns = _reference(inp, lengths, w_qs, w_ks, w_vs, proj_w, a_2, b_2, eps=1e-3)

    assert out.shape == (T, d_model) and out.dtype == jnp.float32
    assert attns.shape == (n_head * len(lengths), max(lengths), max(lengths))
    # Tolerance allows for MXU f32 pass-decomposition differences between the in-kernel
    # Mosaic matmuls and XLA's reference matmuls; typical observed error is far smaller.
    assert jnp.allclose(attns, ref_attns, atol=2e-2, rtol=2e-2), "attn mismatch vs reference"
    assert jnp.allclose(out, ref_out, atol=2e-2, rtol=2e-2), "output mismatch vs reference"

    print("KERNEL_OK")
</pallas_src>

<mosaic_0001>
module attributes {stable_mosaic.version = 11 : i64} {
  func.func @_qkv_proj_kernel(%arg0: i32, %arg1: i32, %arg2: memref<8x32xf32, #tpu.memory_space<vmem>>, %arg3: memref<1x32x8xf32, #tpu.memory_space<vmem>>, %arg4: memref<1x32x8xf32, #tpu.memory_space<vmem>>, %arg5: memref<1x32x8xf32, #tpu.memory_space<vmem>>, %arg6: memref<1x8x8xf32, #tpu.memory_space<vmem>>, %arg7: memref<1x8x8xf32, #tpu.memory_space<vmem>>, %arg8: memref<1x8x8xf32, #tpu.memory_space<vmem>>) attributes {dimension_semantics = [#tpu.dimension_semantics<parallel>, #tpu.dimension_semantics<parallel>], iteration_bounds = array<i64: 2, 2>, scalar_prefetch = 0 : i64, scratch_operands = 0 : i64, tpu.core_type = #tpu.core_type<tc>, window_params = [{transform_indices = @transform_0, window_bounds = array<i64: 8, 32>}, {transform_indices = @transform_1, window_bounds = array<i64: 1, 32, 8>}, {transform_indices = @transform_2, window_bounds = array<i64: 1, 32, 8>}, {transform_indices = @transform_3, window_bounds = array<i64: 1, 32, 8>}, {transform_indices = @transform_4, window_bounds = array<i64: 1, 8, 8>}, {transform_indices = @transform_5, window_bounds = array<i64: 1, 8, 8>}, {transform_indices = @transform_6, window_bounds = array<i64: 1, 8, 8>}]} {
    %c0 = arith.constant 0 : index
    %c0_0 = arith.constant 0 : index
    %0 = vector.load %arg2[%c0, %c0_0] : memref<8x32xf32, #tpu.memory_space<vmem>>, vector<8x32xf32>
    %c0_1 = arith.constant 0 : index
    %c0_2 = arith.constant 0 : index
    %c0_3 = arith.constant 0 : index
    %1 = vector.load %arg3[%c0_1, %c0_2, %c0_3] : memref<1x32x8xf32, #tpu.memory_space<vmem>>, vector<1x32x8xf32>
    %2 = vector.shape_cast %1 : vector<1x32x8xf32> to vector<32x8xf32>
    %cst = arith.constant dense<0.000000e+00> : vector<8x8xf32>
    %3 = tpu.matmul %0, %2, %cst {dimension_numbers = #tpu.dot_dimension_numbers<[1], [0], [0], [1], [0, 0, 1, 1], [], []>} : vector<8x32xf32>, vector<32x8xf32>, vector<8x8xf32> -> vector<8x8xf32>
    %c0_4 = arith.constant 0 : index
    %c0_5 = arith.constant 0 : index
    %c0_6 = arith.constant 0 : index
    %4 = vector.load %arg6[%c0_4, %c0_5, %c0_6] : memref<1x8x8xf32, #tpu.memory_space<vmem>>, vector<1x8x8xf32>
    %5 = vector.shape_cast %4 : vector<1x8x8xf32> to vector<8x8xf32>
    %6 = vector.shape_cast %3 : vector<8x8xf32> to vector<1x8x8xf32>
    tpu.vector_store %arg6[%c0_4, %c0_5, %c0_6], %6 {strides = array<i32>} : memref<1x8x8xf32, #tpu.memory_space<vmem>>, vector<1x8x8xf32>,
    %c0_7 = arith.constant 0 : index
    %c0_8 = arith.constant 0 : index
    %c0_9 = arith.constant 0 : index
    %7 = vector.load %arg4[%c0_7, %c0_8, %c0_9] : memref<1x32x8xf32, #tpu.memory_space<vmem>>, vector<1x32x8xf32>
    %8 = vector.shape_cast %7 : vector<1x32x8xf32> to vector<32x8xf32>
    %cst_10 = arith.constant dense<0.000000e+00> : vector<8x8xf32>
    %9 = tpu.matmul %0, %8, %cst_10 {dimension_numbers = #tpu.dot_dimension_numbers<[1], [0], [0], [1], [0, 0, 1, 1], [], []>} : vector<8x32xf32>, vector<32x8xf32>, vector<8x8xf32> -> vector<8x8xf32>
    %c0_11 = arith.constant 0 : index
    %c0_12 = arith.constant 0 : index
    %c0_13 = arith.constant 0 : index
    %10 = vector.load %arg7[%c0_11, %c0_12, %c0_13] : memref<1x8x8xf32, #tpu.memory_space<vmem>>, vector<1x8x8xf32>
    %11 = vector.shape_cast %10 : vector<1x8x8xf32> to vector<8x8xf32>
    %12 = vector.shape_cast %9 : vector<8x8xf32> to vector<1x8x8xf32>
    tpu.vector_store %arg7[%c0_11, %c0_12, %c0_13], %12 {strides = array<i32>} : memref<1x8x8xf32, #tpu.memory_space<vmem>>, vector<1x8x8xf32>,
    %c0_14 = arith.constant 0 : index
    %c0_15 = arith.constant 0 : index
    %c0_16 = arith.constant 0 : index
    %13 = vector.load %arg5[%c0_14, %c0_15, %c0_16] : memref<1x32x8xf32, #tpu.memory_space<vmem>>, vector<1x32x8xf32>
    %14 = vector.shape_cast %13 : vector<1x32x8xf32> to vector<32x8xf32>
    %cst_17 = arith.constant dense<0.000000e+00> : vector<8x8xf32>
    %15 = tpu.matmul %0, %14, %cst_17 {dimension_numbers = #tpu.dot_dimension_numbers<[1], [0], [0], [1], [0, 0, 1, 1], [], []>} : vector<8x32xf32>, vector<32x8xf32>, vector<8x8xf32> -> vector<8x8xf32>
    %c0_18 = arith.constant 0 : index
    %c0_19 = arith.constant 0 : index
    %c0_20 = arith.constant 0 : index
    %16 = vector.load %arg8[%c0_18, %c0_19, %c0_20] : memref<1x8x8xf32, #tpu.memory_space<vmem>>, vector<1x8x8xf32>
    %17 = vector.shape_cast %16 : vector<1x8x8xf32> to vector<8x8xf32>
    %18 = vector.shape_cast %15 : vector<8x8xf32> to vector<1x8x8xf32>
    tpu.vector_store %arg8[%c0_18, %c0_19, %c0_20], %18 {strides = array<i32>} : memref<1x8x8xf32, #tpu.memory_space<vmem>>, vector<1x8x8xf32>,
    return
  }
  func.func @transform_0(%arg0: i32, %arg1: i32) -> (i32, i32) {
    %c0_i32 = arith.constant 0 : i32
    %c0_i32_0 = arith.constant 0 : i32
    return %arg1, %c0_i32 : i32, i32
  }
  func.func @transform_1(%arg0: i32, %arg1: i32) -> (i32, i32, i32) {
    %c0_i32 = arith.constant 0 : i32
    %c0_i32_0 = arith.constant 0 : i32
    %c0_i32_1 = arith.constant 0 : i32
    return %arg0, %c0_i32, %c0_i32_0 : i32, i32, i32
  }
  func.func @transform_2(%arg0: i32, %arg1: i32) -> (i32, i32, i32) {
    %c0_i32 = arith.constant 0 : i32
    %c0_i32_0 = arith.constant 0 : i32
    %c0_i32_1 = arith.constant 0 : i32
    return %arg0, %c0_i32, %c0_i32_0 : i32, i32, i32
  }
  func.func @transform_3(%arg0: i32, %arg1: i32) -> (i32, i32, i32) {
    %c0_i32 = arith.constant 0 : i32
    %c0_i32_0 = arith.constant 0 : i32
    %c0_i32_1 = arith.constant 0 : i32
    return %arg0, %c0_i32, %c0_i32_0 : i32, i32, i32
  }
  func.func @transform_4(%arg0: i32, %arg1: i32) -> (i32, i32, i32) {
    %c0_i32 = arith.constant 0 : i32
    %c0_i32_0 = arith.constant 0 : i32
    return %arg0, %arg1, %c0_i32 : i32, i32, i32
  }
  func.func @transform_5(%arg0: i32, %arg1: i32) -> (i32, i32, i32) {
    %c0_i32 = arith.constant 0 : i32
    %c0_i32_0 = arith.constant 0 : i32
    return %arg0, %arg1, %c0_i32 : i32, i32, i32
  }
  func.func @transform_6(%arg0: i32, %arg1: i32) -> (i32, i32, i32) {
    %c0_i32 = arith.constant 0 : i32
    %c0_i32_0 = arith.constant 0 : i32
    return %arg0, %arg1, %c0_i32 : i32, i32, i32
  }
}

</mosaic_0001>

<llo_original>
// kernel: tpu_custom_call.1
$region0: #{tpu_custom_call.1}
  #allocation0 [shape = 'u32[]', space=smem, size = 0x4, offset = 0x4, fixed_abs, tag = 'smem constant byte address 0x4 - core index']
  #allocation1 [shape = 'u32[144,128]{1,0:T(1,128)}', space=vmem, size = 0x12000, scoped, tag = 'internal scratch']
  %s0 = inlined_call_operand.vmem [shape: f32[13,32], index: 0, kind: input, shape index: {}]
  %s1 = inlined_call_operand.vmem [shape: f32[2,32,8], index: 1, kind: input, shape index: {}]
  %s2 = inlined_call_operand.vmem [shape: f32[2,32,8], index: 2, kind: input, shape index: {}]
  %s3 = inlined_call_operand.vmem [shape: f32[2,32,8], index: 3, kind: input, shape index: {}]
  %s4 = inlined_call_operand.vmem [shape: f32[2,13,8], index: 4, kind: output, shape index: {0}]
  %s5 = inlined_call_operand.vmem [shape: f32[2,13,8], index: 5, kind: output, shape index: {1}]
  %s6 = inlined_call_operand.vmem [shape: f32[2,13,8], index: 6, kind: output, shape index: {2}]
  %7 = xla_tuple %s4, %s5, %s6
  %s8 = sld [smem:[#allocation0]]
  $region65: #{tpu_custom_call.1} parent=0
    _
  %s10 = ssub.s32 1, %s8
  %s11 = scalar_select 0, %s10, %s8
  loop: start=0, step=1, limit=6
  $region2: #{tpu_custom_call.1} parent=0 // loop_pre_header
    _
  $region3: #{tpu_custom_call.1} parent=0 // loop_header
    %s13 = sphi 0, %s17
    %p14 = scmp.ge.s32.totalorder %s13, 6
    %s20 = sphi 0, %s32
    %s21 = sphi 0, %s28
    %s22 = sphi 0, %s20
    %s23 = sphi 0, %s21
    %s24 = sphi 0, %s22
    %s25 = sphi 0, %s23
    %s35 = sphi 0, %s37
    %s38 = sphi 0, %s35
    %s39 = sphi 0, %s38
    %s55 = sphi 0, %s39
    %s61 = sphi 0, %s63
    %s64 = sphi 0, %s61
    %s65 = sphi 0, %s64
    %s81 = sphi 0, %s65
    %s87 = sphi 0, %s89
    %s90 = sphi 0, %s87
    %s91 = sphi 0, %s90
    %s107 = sphi 0, %s91
    %s113 = sphi 0, %s115
    %s116 = sphi 0, %s113
    %s117 = sphi 0, %s116
    %s133 = sphi 0, %s117
    %s141 = sphi 0, %s143
    %s144 = sphi 0, %s141
    %s145 = sphi 0, %s144
    %s161 = sphi 0, %s145
    %s169 = sphi 0, %s171
    %s172 = sphi 0, %s169
    %s173 = sphi 0, %s172
    %s189 = sphi 0, %s173
    %s197 = sphi 0, %s199
    %s200 = sphi 0, %s197
    %s201 = sphi 0, %s200
    %s217 = sphi 0, %s201
  $region4: #{tpu_custom_call.1} parent=0 // loop_header_branch
    %16 = sbr.rel (%p14) target = $region8
  $region5: #{tpu_custom_call.1} parent=0 // loop_body
    %s18 = ssub.s32 %s13, 1
    %s19 = ssub.s32 %s13, 2
    %s26 = sadd.s32 1, %s21
    %p27 = scmp.ge.s32.totalorder %s26, 2
    %s28 = scalar_select %p27, 0, %s26
    %s29 = sadd.s32 1, %s20
    %s30 = scalar_select %p27, %s29, %s20
    %p31 = scmp.ge.s32.totalorder %s30, 2
    %s32 = scalar_select %p31, 0, %s30
    %s33 = ssub.s32 %s21, %s28
    %p34 = scmp.eq.s32.totalorder %s33, 0
    %s36 = sadd.s32 %s35, 1
    %s37 = scalar_select %p34, %s35, %s36
    %p40 = pneg %p34
    %p41 = scmp.eq.s32.totalorder %s13, 3
    %p42 = por %p40, %p41
    %p43 = scmp.ne.s32.totalorder %s35, %s38
    %p44 = scmp.eq.s32.totalorder %s13, 0
    %p45 = por %p43, %p44
    %p46 = scmp.ne.s32.totalorder %s35, %s38
    %p47 = scmp.eq.s32.totalorder %s18, 3
    %p48 = por %p46, %p47
    %p49 = scmp.ne.s32.totalorder %s38, %s39
    %p50 = scmp.eq.s32.totalorder %s18, 0
    %p51 = por %p49, %p50
    %p52 = scmp.ne.s32.totalorder %s38, %s39
    %p53 = scmp.eq.s32.totalorder %s19, 3
    %p54 = por %p52, %p53
    %p56 = scmp.ne.s32.totalorder %s39, %s55
    %p57 = scmp.eq.s32.totalorder %s19, 0
    %p58 = por %p56, %p57
    %s59 = ssub.s32 %s20, %s32
    %p60 = scmp.eq.s32.totalorder %s59, 0
    %s62 = sadd.s32 %s61, 1
    %s63 = scalar_select %p60, %s61, %s62
    %p66 = pneg %p60
    %p67 = scmp.eq.s32.totalorder %s13, 3
    %p68 = por %p66, %p67
    %p69 = scmp.ne.s32.totalorder %s61, %s64
    %p70 = scmp.eq.s32.totalorder %s13, 0
    %p71 = por %p69, %p70
    %p72 = scmp.ne.s32.totalorder %s61, %s64
    %p73 = scmp.eq.s32.totalorder %s18, 3
    %p74 = por %p72, %p73
    %p75 = scmp.ne.s32.totalorder %s64, %s65
    %p76 = scmp.eq.s32.totalorder %s18, 0
    %p77 = por %p75, %p76
    %p78 = scmp.ne.s32.totalorder %s64, %s65
    %p79 = scmp.eq.s32.totalorder %s19, 3
    %p80 = por %p78, %p79
    %p82 = scmp.ne.s32.totalorder %s65, %s81
    %p83 = scmp.eq.s32.totalorder %s19, 0
    %p84 = por %p82, %p83
    %s85 = ssub.s32 %s20, %s32
    %p86 = scmp.eq.s32.totalorder %s85, 0
    %s88 = sadd.s32 %s87, 1
    %s89 = scalar_select %p86, %s87, %s88
    %p92 = pneg %p86
    %p93 = scmp.eq.s32.totalorder %s13, 3
    %p94 = por %p92, %p93
    %p95 = scmp.ne.s32.totalorder %s87, %s90
    %p96 = scmp.eq.s32.totalorder %s13, 0
    %p97 = por %p95, %p96
    %p98 = scmp.ne.s32.totalorder %s87, %s90
    %p99 = scmp.eq.s32.totalorder %s18, 3
    %p100 = por %p98, %p99
    %p101 = scmp.ne.s32.totalorder %s90, %s91
    %p102 = scmp.eq.s32.totalorder %s18, 0
    %p103 = por %p101, %p102
    %p104 = scmp.ne.s32.totalorder %s90, %s91
    %p105 = scmp.eq.s32.totalorder %s19, 3
    %p106 = por %p104, %p105
    %p108 = scmp.ne.s32.totalorder %s91, %s107
    %p109 = scmp.eq.s32.totalorder %s19, 0
    %p110 = por %p108, %p109
    %s111 = ssub.s32 %s20, %s32
    %p112 = scmp.eq.s32.totalorder %s111, 0
    %s114 = sadd.s32 %s113, 1
    %s115 = scalar_select %p112, %s113, %s114
    %p118 = pneg %p112
    %p119 = scmp.eq.s32.totalorder %s13, 3
    %p120 = por %p118, %p119
    %p121 = scmp.ne.s32.totalorder %s113, %s116
    %p122 = scmp.eq.s32.totalorder %s13, 0
    %p123 = por %p121, %p122
    %p124 = scmp.ne.s32.totalorder %s113, %s116
    %p125 = scmp.eq.s32.totalorder %s18, 3
    %p126 = por %p124, %p125
    %p127 = scmp.ne.s32.totalorder %s116, %s117
    %p128 = scmp.eq.s32.totalorder %s18, 0
    %p129 = por %p127, %p128
    %p130 = scmp.ne.s32.totalorder %s116, %s117
    %p131 = scmp.eq.s32.totalorder %s19, 3
    %p132 = por %p130, %p131
    %p134 = scmp.ne.s32.totalorder %s117, %s133
    %p135 = scmp.eq.s32.totalorder %s19, 0
    %p136 = por %p134, %p135
    %s137 = ssub.s32 %s20, %s32
    %s138 = ssub.s32 %s21, %s28
    %s139 = sor.u32 %s137, %s138
    %p140 = scmp.eq.s32.totalorder %s139, 0
    %s142 = sadd.s32 %s141, 1
    %s143 = scalar_select %p140, %s141, %s142
    %p146 = pneg %p140
    %p147 = scmp.eq.s32.totalorder %s13, 3
    %p148 = por %p146, %p147
    %p149 = scmp.ne.s32.totalorder %s141, %s144
    %p150 = scmp.eq.s32.totalorder %s13, 0
    %p151 = por %p149, %p150
    %p152 = scmp.ne.s32.totalorder %s141, %s144
    %p153 = scmp.eq.s32.totalorder %s18, 3
    %p154 = por %p152, %p153
    %p155 = scmp.ne.s32.totalorder %s144, %s145
    %p156 = scmp.eq.s32.totalorder %s18, 0
    %p157 = por %p155, %p156
    %p158 = scmp.ne.s32.totalorder %s144, %s145
    %p159 = scmp.eq.s32.totalorder %s19, 3
    %p160 = por %p158, %p159
    %p162 = scmp.ne.s32.totalorder %s145, %s161
    %p163 = scmp.eq.s32.totalorder %s19, 0
    %p164 = por %p162, %p163
    %s165 = ssub.s32 %s20, %s32
    %s166 = ssub.s32 %s21, %s28
    %s167 = sor.u32 %s165, %s166
    %p168 = scmp.eq.s32.totalorder %s167, 0
    %s170 = sadd.s32 %s169, 1
    %s171 = scalar_select %p168, %s169, %s170
    %p174 = pneg %p168
    %p175 = scmp.eq.s32.totalorder %s13, 3
    %p176 = por %p174, %p175
    %p177 = scmp.ne.s32.totalorder %s169, %s172
    %p178 = scmp.eq.s32.totalorder %s13, 0
    %p179 = por %p177, %p178
    %p180 = scmp.ne.s32.totalorder %s169, %s172
    %p181 = scmp.eq.s32.totalorder %s18, 3
    %p182 = por %p180, %p181
    %p183 = scmp.ne.s32.totalorder %s172, %s173
    %p184 = scmp.eq.s32.totalorder %s18, 0
    %p185 = por %p183, %p184
    %p186 = scmp.ne.s32.totalorder %s172, %s173
    %p187 = scmp.eq.s32.totalorder %s19, 3
    %p188 = por %p186, %p187
    %p190 = scmp.ne.s32.totalorder %s173, %s189
    %p191 = scmp.eq.s32.totalorder %s19, 0
    %p192 = por %p190, %p191
    %s193 = ssub.s32 %s20, %s32
    %s194 = ssub.s32 %s21, %s28
    %s195 = sor.u32 %s193, %s194
    %p196 = scmp.eq.s32.totalorder %s195, 0
    %s198 = sadd.s32 %s197, 1
    %s199 = scalar_select %p196, %s197, %s198
    %p202 = pneg %p196
    %p203 = scmp.eq.s32.totalorder %s13, 3
    %p204 = por %p202, %p203
    %p205 = scmp.ne.s32.totalorder %s197, %s200
    %p206 = scmp.eq.s32.totalorder %s13, 0
    %p207 = por %p205, %p206
    %p208 = scmp.ne.s32.totalorder %s197, %s200
    %p209 = scmp.eq.s32.totalorder %s18, 3
    %p210 = por %p208, %p209
    %p211 = scmp.ne.s32.totalorder %s200, %s201
    %p212 = scmp.eq.s32.totalorder %s18, 0
    %p213 = por %p211, %p212
    %p214 = scmp.ne.s32.totalorder %s200, %s201
    %p215 = scmp.eq.s32.totalorder %s19, 3
    %p216 = por %p214, %p215
    %p218 = scmp.ne.s32.totalorder %s201, %s217
    %p219 = scmp.eq.s32.totalorder %s19, 0
    %p220 = por %p218, %p219
    %p221 = scmp.le.s32.totalorder 1, %s13
    %p222 = scmp.lt.s32.totalorder %s13, 5
    %p223 = pnand %p221, %p222
    %p224 = pneg %p223
    // Predicated region
    $region9: #{tpu_custom_call.1} parent=5 // pred_check
      _
    $region10: #{tpu_custom_call.1} parent=5 // pred_check_branch
      %226 = sbr.rel (%p223) target = $region12
    $region11: #{tpu_custom_call.1} parent=5 // pred_region
      %s227 = ssub.s32 %s13, 1
    $region12: #{tpu_custom_call.1} parent=5 // pred_fallthru
      _
    %p228 = scmp.lt.s32.totalorder %s13, 4
    // Predicated region
    $region13: #{tpu_custom_call.1} parent=5 // pred_check
      %p229 = pneg %p228
    $region14: #{tpu_custom_call.1} parent=5 // pred_check_branch
      %231 = sbr.rel (%p229) target = $region16
    $region15: #{tpu_custom_call.1} parent=5 // pred_region
      // Predicated region
      $region17: #{tpu_custom_call.1} parent=15 // pred_check
        %p232 = pneg %p45
      $region18: #{tpu_custom_call.1} parent=15 // pred_check_branch
        %234 = sbr.rel (%p232) target = $region20
      $region19: #{tpu_custom_call.1} parent=15 // pred_region
        %p235 = scmp.lt.s32.totalorder %s21, 1
        %s236 = scalar_select %p235, %s21, 1
        %s237 = smul.addr %s236, 8
        %s238 = scalar_lea.vmem %s0, %s237
      $region20: #{tpu_custom_call.1} parent=15 // pred_fallthru
        _
      // Predicated region
      $region21: #{tpu_custom_call.1} parent=15 // pred_check
        %p239 = pneg %p71
      $region22: #{tpu_custom_call.1} parent=15 // pred_check_branch
        %241 = sbr.rel (%p239) target = $region24
      $region23: #{tpu_custom_call.1} parent=15 // pred_region
        %p242 = scmp.lt.s32.totalorder %s20, 1
        %s243 = scalar_select %p242, %s20, 1
        %s244 = smul.addr %s243, 4
        %s245 = smul.addr %s244, 8
        %s246 = scalar_lea.vmem %s1, %s245
      $region24: #{tpu_custom_call.1} parent=15 // pred_fallthru
        _
      // Predicated region
      $region25: #{tpu_custom_call.1} parent=15 // pred_check
        %p247 = pneg %p97
      $region26: #{tpu_custom_call.1} parent=15 // pred_check_branch
        %249 = sbr.rel (%p247) target = $region28
      $region27: #{tpu_custom_call.1} parent=15 // pred_region
        %p250 = scmp.lt.s32.totalorder %s20, 1
        %s251 = scalar_select %p250, %s20, 1
        %s252 = smul.addr %s251, 4
        %s253 = smul.addr %s252, 8
        %s254 = scalar_lea.vmem %s2, %s253
      $region28: #{tpu_custom_call.1} parent=15 // pred_fallthru
        _
      // Predicated region
      $region29: #{tpu_custom_call.1} parent=15 // pred_check
        %p255 = pneg %p123
      $region30: #{tpu_custom_call.1} parent=15 // pred_check_branch
        %257 = sbr.rel (%p255) target = $region32
      $region31: #{tpu_custom_call.1} parent=15 // pred_region
        %p258 = scmp.lt.s32.totalorder %s20, 1
        %s259 = scalar_select %p258, %s20, 1
        %s260 = smul.addr %s259, 4
        %s261 = smul.addr %s260, 8
        %s262 = scalar_lea.vmem %s3, %s261
      $region32: #{tpu_custom_call.1} parent=15 // pred_fallthru
        _
    $region16: #{tpu_custom_call.1} parent=5 // pred_fallthru
      _
    %p263 = scmp.le.s32.totalorder 1, %s13
    %p264 = scmp.lt.s32.totalorder %s13, 5
    %p265 = pnand %p263, %p264
    %p266 = pneg %p265
    // Predicated region
    $region33: #{tpu_custom_call.1} parent=5 // pred_check
      _
    $region34: #{tpu_custom_call.1} parent=5 // pred_check_branch
      %268 = sbr.rel (%p265) target = $region36
    $region35: #{tpu_custom_call.1} parent=5 // pred_region
      %s269 = ssub.s32 %s13, 1
      %p270 = scmp.lt.s32.totalorder %s23, 1
      %s271 = scalar_select %p270, %s23, 1
      %s272 = smul.addr %s271, 8
      %s273 = scalar_lea.vmem %s0, %s272
      %p274 = pneg %p51
      %p275 = pneg %p48
      %p276 = scmp.lt.s32.totalorder %s22, 1
      %s277 = scalar_select %p276, %s22, 1
      %s278 = smul.addr %s277, 4
      %s279 = smul.addr %s278, 8
      %s280 = scalar_lea.vmem %s1, %s279
      %p281 = pneg %p77
      %p282 = pneg %p74
      %p283 = scmp.lt.s32.totalorder %s22, 1
      %s284 = scalar_select %p283, %s22, 1
      %s285 = smul.addr %s284, 4
      %s286 = smul.addr %s285, 8
      %s287 = scalar_lea.vmem %s2, %s286
      %p288 = pneg %p103
      %p289 = pneg %p100
      %p290 = scmp.lt.s32.totalorder %s22, 1
      %s291 = scalar_select %p290, %s22, 1
      %s292 = smul.addr %s291, 4
      %s293 = smul.addr %s292, 8
      %s294 = scalar_lea.vmem %s3, %s293
      %p295 = pneg %p129
      %p296 = pneg %p126
      %p297 = pneg %p157
      %p298 = pneg %p154
      %p299 = scmp.lt.s32.totalorder %s22, 1
      %s300 = scalar_select %p299, %s22, 1
      %p301 = scmp.lt.s32.totalorder %s23, 1
      %s302 = scalar_select %p301, %s23, 1
      %s303 = smul.addr %s300, 2
      %s304 = sadd.s32 %s302, %s303
      %s305 = smul.addr %s304, 8
      %s306 = scalar_lea.vmem %s4, %s305
      %p307 = pneg %p185
      %p308 = pneg %p182
      %p309 = scmp.lt.s32.totalorder %s22, 1
      %s310 = scalar_select %p309, %s22, 1
      %p311 = scmp.lt.s32.totalorder %s23, 1
      %s312 = scalar_select %p311, %s23, 1
      %s313 = smul.addr %s310, 2
      %s314 = sadd.s32 %s312, %s313
      %s315 = smul.addr %s314, 8
      %s316 = scalar_lea.vmem %s5, %s315
      %p317 = pneg %p213
      %p318 = pneg %p210
      %p319 = scmp.lt.s32.totalorder %s22, 1
      %s320 = scalar_select %p319, %s22, 1
      %p321 = scmp.lt.s32.totalorder %s23, 1
      %s322 = scalar_select %p321, %s23, 1
      %s323 = smul.addr %s320, 2
      %s324 = sadd.s32 %s322, %s323
      %s325 = smul.addr %s324, 8
      %s326 = scalar_lea.vmem %s6, %s325
      %p327 = scmp.lt.s32.totalorder %s23, 1
      %s328 = scalar_select %p327, %s23, 1
      %s329 = smul.addr %s328, 8
      %s330 = scalar_lea.vmem %s0, %s329
      %p331 = scmp.lt.s32.totalorder %s22, 1
      %s332 = scalar_select %p331, %s22, 1
      %s333 = smul.addr %s332, 4
      %s334 = smul.addr %s333, 8
      %s335 = scalar_lea.vmem %s1, %s334
      %p336 = scmp.lt.s32.totalorder %s22, 1
      %s337 = scalar_select %p336, %s22, 1
      %s338 = smul.addr %s337, 4
      %s339 = smul.addr %s338, 8
      %s340 = scalar_lea.vmem %s2, %s339
      %p341 = scmp.lt.s32.totalorder %s22, 1
      %s342 = scalar_select %p341, %s22, 1
      %s343 = smul.addr %s342, 4
      %s344 = smul.addr %s343, 8
      %s345 = scalar_lea.vmem %s3, %s344
      %p346 = scmp.lt.s32.totalorder %s22, 1
      %s347 = scalar_select %p346, %s22, 1
      %p348 = scmp.lt.s32.totalorder %s23, 1
      %s349 = scalar_select %p348, %s23, 1
      %s350 = smul.addr %s347, 2
      %s351 = sadd.s32 %s349, %s350
      %s352 = smul.addr %s351, 8
      %s353 = scalar_lea.vmem %s4, %s352
      %p354 = scmp.lt.s32.totalorder %s22, 1
      %s355 = scalar_select %p354, %s22, 1
      %p356 = scmp.lt.s32.totalorder %s23, 1
      %s357 = scalar_select %p356, %s23, 1
      %s358 = smul.addr %s355, 2
      %s359 = sadd.s32 %s357, %s358
      %s360 = smul.addr %s359, 8
      %s361 = scalar_lea.vmem %s5, %s360
      %p362 = scmp.lt.s32.totalorder %s22, 1
      %s363 = scalar_select %p362, %s22, 1
      %p364 = scmp.lt.s32.totalorder %s23, 1
      %s365 = scalar_select %p364, %s23, 1
      %s366 = smul.addr %s363, 2
      %s367 = sadd.s32 %s365, %s366
      %s368 = smul.addr %s367, 8
      %s369 = scalar_lea.vmem %s6, %s368
      %v370 = vld [vmem:[%s330] sm:$0xff]
      %v371 = vld [vmem:[%s335] sm:$0xff]
      %v372 = vld [vmem:[%s335 + $0x8] sm:$0xff]
      %v373 = vld [vmem:[%s335 + $0x10] sm:$0xff]
      %v374 = vld [vmem:[%s335 + $0x18] sm:$0xff]
      %vm375 = vcmask 261120
      %v377 = vsel %vm375, %v370, 0
      %379 = vmatprep.subr.mxu0 0.0
      %380 = vmatpush1.msra.mxu0 %v371
      %381 = vmatprep.subr.mxu0 0.0
      %382 = vmatpush1.msra.mxu0 %v372
      %383 = vmatprep.subr.mxu0 0.0
      %384 = vmatpush1.msra.mxu0 %v373
      %385 = vmatprep.subr.mxu0 0.0
      %386 = vmatpush1.msra.mxu0 %v374
      %387 = vmatprep.subr.mxu0 0.0
      %388 = vmatpush1.msra.mxu0 0.0
      %389 = vmatprep.subr.mxu0 0.0
      %390 = vmatpush1.msra.mxu0 0.0
      %391 = vmatprep.subr.mxu0 0.0
      %392 = vmatpush1.msra.mxu0 0.0
      %393 = vmatprep.subr.mxu0 0.0
      %394 = vmatpush1.msra.mxu0 0.0
      %395 = vmatprep.subr.mxu0 0.0
      %396 = vmatpush1.msra.mxu0 0.0
      %397 = vmatprep.subr.mxu0 0.0
      %398 = vmatpush1.msra.mxu0 0.0
      %399 = vmatprep.subr.mxu0 0.0
      %400 = vmatpush1.msra.mxu0 0.0
      %401 = vmatprep.subr.mxu0 0.0
      %402 = vmatpush1.msra.mxu0 0.0
      %403 = vmatprep.subr.mxu0 0.0
      %404 = vmatpush1.msra.mxu0 0.0
      %405 = vmatprep.subr.mxu0 0.0
      %406 = vmatpush1.msra.mxu0 0.0
      %407 = vmatprep.subr.mxu0 0.0
      %408 = vmatpush1.msra.mxu0 0.0
      %409 = vmatprep.subr.mxu0 0.0
      %410 = vmatpush1.msra.mxu0 0.0
      %411 = vmatprep.subr.mxu0 0.0
      %412 = vmatpush1.msra.mxu0 0.0
      %413 = vmatprep.subr.mxu0 0.0
      %414 = vmatpush1.msra.mxu0 0.0
      %415 = vmatprep.subr.mxu0 0.0
      %416 = vmatpush1.msra.mxu0 0.0
      %417 = vmatprep.subr.mxu0 0.0
      %418 = vmatpush1.msra.mxu0 0.0
      %419 = vmatprep.subr.mxu0 0.0
      %420 = vmatpush1.msra.mxu0 0.0
      %421 = vmatprep.subr.mxu0 0.0
      %422 = vmatpush1.msra.mxu0 0.0
      %423 = vmatprep.subr.mxu0 0.0
      %424 = vmatpush1.msra.mxu0 0.0
      %425 = vmatprep.subr.mxu0 0.0
      %426 = vmatpush1.msra.mxu0 0.0
      %427 = vmatprep.subr.mxu0 0.0
      %428 = vmatpush1.msra.mxu0 0.0
      %429 = vmatprep.subr.mxu0 0.0
      %430 = vmatpush1.msra.mxu0 0.0
      %431 = vmatprep.subr.mxu0 0.0
      %432 = vmatpush1.msra.mxu0 0.0
      %433 = vmatprep.subr.mxu0 0.0
      %434 = vmatpush1.msra.mxu0 0.0
      %435 = vmatprep.subr.mxu0 0.0
      %436 = vmatpush1.msra.mxu0 0.0
      %437 = vmatprep.subr.mxu0 0.0
      %438 = vmatpush1.msra.mxu0 0.0
      %439 = vmatprep.subr.mxu0 0.0
      %440 = vmatpush1.msra.mxu0 0.0
      %441 = vmatprep.subr.mxu0 0.0
      %442 = vmatpush1.msra.mxu0 0.0
      %443 = vmatprep.mubr.f32.mxu0 0.0
      %444 = vmatmul.mubr.f32.gmra.mrb[0].mxu0 %v377
      %v445 = vpop.f32.mrb[0].mxu0
      %v446 = vadd.f32 0.0, %v445
      %v447 = vpop.f32.mrb[0].mxu0
      %448 = vdwg.mxu0
      %vm449 = vcmask 64512
      %450 = vst.msk [vmem:[%s353] sm:$0xff] %vm449, %v446
      %v451 = vld [vmem:[%s340] sm:$0xff]
      %v452 = vld [vmem:[%s340 + $0x8] sm:$0xff]
      %v453 = vld [vmem:[%s340 + $0x10] sm:$0xff]
      %v454 = vld [vmem:[%s340 + $0x18] sm:$0xff]
      %455 = vmatprep.subr.mxu0 0.0
      %456 = vmatpush1.msra.mxu0 %v451
      %457 = vmatprep.subr.mxu0 0.0
      %458 = vmatpush1.msra.mxu0 %v452
      %459 = vmatprep.subr.mxu0 0.0
      %460 = vmatpush1.msra.mxu0 %v453
      %461 = vmatprep.subr.mxu0 0.0
      %462 = vmatpush1.msra.mxu0 %v454
      %463 = vmatprep.subr.mxu0 0.0
      %464 = vmatpush1.msra.mxu0 0.0
      %465 = vmatprep.subr.mxu0 0.0
      %466 = vmatpush1.msra.mxu0 0.0
      %467 = vmatprep.subr.mxu0 0.0
      %468 = vmatpush1.msra.mxu0 0.0
      %469 = vmatprep.subr.mxu0 0.0
      %470 = vmatpush1.msra.mxu0 0.0
      %471 = vmatprep.subr.mxu0 0.0
      %472 = vmatpush1.msra.mxu0 0.0
      %473 = vmatprep.subr.mxu0 0.0
      %474 = vmatpush1.msra.mxu0 0.0
      %475 = vmatprep.subr.mxu0 0.0
      %476 = vmatpush1.msra.mxu0 0.0
      %477 = vmatprep.subr.mxu0 0.0
      %478 = vmatpush1.msra.mxu0 0.0
      %479 = vmatprep.subr.mxu0 0.0
      %480 = vmatpush1.msra.mxu0 0.0
      %481 = vmatprep.subr.mxu0 0.0
      %482 = vmatpush1.msra.mxu0 0.0
      %483 = vmatprep.subr.mxu0 0.0
      %484 = vmatpush1.msra.mxu0 0.0
      %485 = vmatprep.subr.mxu0 0.0
      %486 = vmatpush1.msra.mxu0 0.0
      %487 = vmatprep.subr.mxu0 0.0
      %488 = vmatpush1.msra.mxu0 0.0
      %489 = vmatprep.subr.mxu0 0.0
      %490 = vmatpush1.msra.mxu0 0.0
      %491 = vmatprep.subr.mxu0 0.0
      %492 = vmatpush1.msra.mxu0 0.0
      %493 = vmatprep.subr.mxu0 0.0
      %494 = vmatpush1.msra.mxu0 0.0
      %495 = vmatprep.subr.mxu0 0.0
      %496 = vmatpush1.msra.mxu0 0.0
      %497 = vmatprep.subr.mxu0 0.0
      %498 = vmatpush1.msra.mxu0 0.0
      %499 = vmatprep.subr.mxu0 0.0
      %500 = vmatpush1.msra.mxu0 0.0
      %501 = vmatprep.subr.mxu0 0.0
      %502 = vmatpush1.msra.mxu0 0.0
      %503 = vmatprep.subr.mxu0 0.0
      %504 = vmatpush1.msra.mxu0 0.0
      %505 = vmatprep.subr.mxu0 0.0
      %506 = vmatpush1.msra.mxu0 0.0
      %507 = vmatprep.subr.mxu0 0.0
      %508 = vmatpush1.msra.mxu0 0.0
      %509 = vmatprep.subr.mxu0 0.0
      %510 = vmatpush1.msra.mxu0 0.0
      %511 = vmatprep.subr.mxu0 0.0
      %512 = vmatpush1.msra.mxu0 0.0
      %513 = vmatprep.subr.mxu0 0.0
      %514 = vmatpush1.msra.mxu0 0.0
      %515 = vmatprep.subr.mxu0 0.0
      %516 = vmatpush1.msra.mxu0 0.0
      %517 = vmatprep.subr.mxu0 0.0
      %518 = vmatpush1.msra.mxu0 0.0
      %519 = vmatprep.mubr.f32.mxu0 0.0
      %520 = vmatmul.mubr.f32.gmra.mrb[0].mxu0 %v377
      %v521 = vpop.f32.mrb[0].mxu0
      %v522 = vadd.f32 0.0, %v521
      %v523 = vpop.f32.mrb[0].mxu0
      %524 = vdwg.mxu0
      %525 = vst.msk [vmem:[%s361] sm:$0xff] %vm449, %v522
      %v526 = vld [vmem:[%s345] sm:$0xff]
      %v527 = vld [vmem:[%s345 + $0x8] sm:$0xff]
      %v528 = vld [vmem:[%s345 + $0x10] sm:$0xff]
      %v529 = vld [vmem:[%s345 + $0x18] sm:$0xff]
      %530 = vmatprep.subr.mxu0 0.0
      %531 = vmatpush1.msra.mxu0 %v526
      %532 = vmatprep.subr.mxu0 0.0
      %533 = vmatpush1.msra.mxu0 %v527
      %534 = vmatprep.subr.mxu0 0.0
      %535 = vmatpush1.msra.mxu0 %v528
      %536 = vmatprep.subr.mxu0 0.0
      %537 = vmatpush1.msra.mxu0 %v529
      %538 = vmatprep.subr.mxu0 0.0
      %539 = vmatpush1.msra.mxu0 0.0
      %540 = vmatprep.subr.mxu0 0.0
      %541 = vmatpush1.msra.mxu0 0.0
      %542 = vmatprep.subr.mxu0 0.0
      %543 = vmatpush1.msra.mxu0 0.0
      %544 = vmatprep.subr.mxu0 0.0
      %545 = vmatpush1.msra.mxu0 0.0
      %546 = vmatprep.subr.mxu0 0.0
      %547 = vmatpush1.msra.mxu0 0.0
      %548 = vmatprep.subr.mxu0 0.0
      %549 = vmatpush1.msra.mxu0 0.0
      %550 = vmatprep.subr.mxu0 0.0
      %551 = vmatpush1.msra.mxu0 0.0
      %552 = vmatprep.subr.mxu0 0.0
      %553 = vmatpush1.msra.mxu0 0.0
      %554 = vmatprep.subr.mxu0 0.0
      %555 = vmatpush1.msra.mxu0 0.0
      %556 = vmatprep.subr.mxu0 0.0
      %557 = vmatpush1.msra.mxu0 0.0
      %558 = vmatprep.subr.mxu0 0.0
      %559 = vmatpush1.msra.mxu0 0.0
      %560 = vmatprep.subr.mxu0 0.0
      %561 = vmatpush1.msra.mxu0 0.0
      %562 = vmatprep.subr.mxu0 0.0
      %563 = vmatpush1.msra.mxu0 0.0
      %564 = vmatprep.subr.mxu0 0.0
      %565 = vmatpush1.msra.mxu0 0.0
      %566 = vmatprep.subr.mxu0 0.0
      %567 = vmatpush1.msra.mxu0 0.0
      %568 = vmatprep.subr.mxu0 0.0
      %569 = vmatpush1.msra.mxu0 0.0
      %570 = vmatprep.subr.mxu0 0.0
      %571 = vmatpush1.msra.mxu0 0.0
      %572 = vmatprep.subr.mxu0 0.0
      %573 = vmatpush1.msra.mxu0 0.0
      %574 = vmatprep.subr.mxu0 0.0
      %575 = vmatpush1.msra.mxu0 0.0
      %576 = vmatprep.subr.mxu0 0.0
      %577 = vmatpush1.msra.mxu0 0.0
      %578 = vmatprep.subr.mxu0 0.0
      %579 = vmatpush1.msra.mxu0 0.0
      %580 = vmatprep.subr.mxu0 0.0
      %581 = vmatpush1.msra.mxu0 0.0
      %582 = vmatprep.subr.mxu0 0.0
      %583 = vmatpush1.msra.mxu0 0.0
      %584 = vmatprep.subr.mxu0 0.0
      %585 = vmatpush1.msra.mxu0 0.0
      %586 = vmatprep.subr.mxu0 0.0
      %587 = vmatpush1.msra.mxu0 0.0
      %588 = vmatprep.subr.mxu0 0.0
      %589 = vmatpush1.msra.mxu0 0.0
      %590 = vmatprep.subr.mxu0 0.0
      %591 = vmatpush1.msra.mxu0 0.0
      %592 = vmatprep.subr.mxu0 0.0
      %593 = vmatpush1.msra.mxu0 0.0
      %594 = vmatprep.mubr.f32.mxu0 0.0
      %595 = vmatmul.mubr.f32.gmra.mrb[0].mxu0 %v377
      %v596 = vpop.f32.mrb[0].mxu0
      %v597 = vadd.f32 0.0, %v596
      %v598 = vpop.f32.mrb[0].mxu0
      %599 = vdwg.mxu0
      %600 = vst.msk [vmem:[%s369] sm:$0xff] %vm449, %v597
      %p601 = scmp.lt.s32.totalorder %s22, 1
      %s602 = scalar_select %p601, %s22, 1
      %p603 = scmp.lt.s32.totalorder %s23, 1
      %s604 = scalar_select %p603, %s23, 1
      %s605 = smul.addr %s602, 2
      %s606 = sadd.s32 %s604, %s605
      %s607 = smul.addr %s606, 8
      %s608 = scalar_lea.vmem %s4, %s607
      %p609 = scmp.lt.s32.totalorder %s22, 1
      %s610 = scalar_select %p609, %s22, 1
      %p611 = scmp.lt.s32.totalorder %s23, 1
      %s612 = scalar_select %p611, %s23, 1
      %s613 = smul.addr %s610, 2
      %s614 = sadd.s32 %s612, %s613
      %s615 = smul.addr %s614, 8
      %s616 = scalar_lea.vmem %s5, %s615
      %p617 = scmp.lt.s32.totalorder %s22, 1
      %s618 = scalar_select %p617, %s22, 1
      %p619 = scmp.lt.s32.totalorder %s23, 1
      %s620 = scalar_select %p619, %s23, 1
      %s621 = smul.addr %s618, 2
      %s622 = sadd.s32 %s620, %s621
      %s623 = smul.addr %s622, 8
      %s624 = scalar_lea.vmem %s6, %s623
      // Predicated region
      $region37: #{tpu_custom_call.1} parent=35 // pred_check
        %p625 = pneg %p154
      $region38: #{tpu_custom_call.1} parent=35 // pred_check_branch
        %627 = sbr.rel (%p625) target = $region40
      $region39: #{tpu_custom_call.1} parent=35 // pred_region
        _
      $region40: #{tpu_custom_call.1} parent=35 // pred_fallthru
        _
      // Predicated region
      $region41: #{tpu_custom_call.1} parent=35 // pred_check
        %p628 = pneg %p182
      $region42: #{tpu_custom_call.1} parent=35 // pred_check_branch
        %630 = sbr.rel (%p628) target = $region44
      $region43: #{tpu_custom_call.1} parent=35 // pred_region
        _
      $region44: #{tpu_custom_call.1} parent=35 // pred_fallthru
        _
      // Predicated region
      $region45: #{tpu_custom_call.1} parent=35 // pred_check
        %p631 = pneg %p210
      $region46: #{tpu_custom_call.1} parent=35 // pred_check_branch
        %633 = sbr.rel (%p631) target = $region48
      $region47: #{tpu_custom_call.1} parent=35 // pred_region
        _
      $region48: #{tpu_custom_call.1} parent=35 // pred_fallthru
        _
    $region36: #{tpu_custom_call.1} parent=5 // pred_fallthru
      _
    %p634 = scmp.le.s32.totalorder 2, %s13
    // Predicated region
    $region49: #{tpu_custom_call.1} parent=5 // pred_check
      %p635 = pneg %p634
    $region50: #{tpu_custom_call.1} parent=5 // pred_check_branch
      %637 = sbr.rel (%p635) target = $region52
    $region51: #{tpu_custom_call.1} parent=5 // pred_region
      %s638 = ssub.s32 %s13, 2
      // Predicated region
      $region53: #{tpu_custom_call.1} parent=51 // pred_check
        %p639 = pneg %p160
      $region54: #{tpu_custom_call.1} parent=51 // pred_check_branch
        %641 = sbr.rel (%p639) target = $region56
      $region55: #{tpu_custom_call.1} parent=51 // pred_region
        %p642 = scmp.lt.s32.totalorder %s24, 1
        %s643 = scalar_select %p642, %s24, 1
        %p644 = scmp.lt.s32.totalorder %s25, 1
        %s645 = scalar_select %p644, %s25, 1
        %s646 = smul.addr %s643, 2
        %s647 = sadd.s32 %s645, %s646
        %s648 = smul.addr %s647, 8
        %s649 = scalar_lea.vmem %s4, %s648
      $region56: #{tpu_custom_call.1} parent=51 // pred_fallthru
        _
      // Predicated region
      $region57: #{tpu_custom_call.1} parent=51 // pred_check
        %p650 = pneg %p188
      $region58: #{tpu_custom_call.1} parent=51 // pred_check_branch
        %652 = sbr.rel (%p650) target = $region60
      $region59: #{tpu_custom_call.1} parent=51 // pred_region
        %p653 = scmp.lt.s32.totalorder %s24, 1
        %s654 = scalar_select %p653, %s24, 1
        %p655 = scmp.lt.s32.totalorder %s25, 1
        %s656 = scalar_select %p655, %s25, 1
        %s657 = smul.addr %s654, 2
        %s658 = sadd.s32 %s656, %s657
        %s659 = smul.addr %s658, 8
        %s660 = scalar_lea.vmem %s5, %s659
      $region60: #{tpu_custom_call.1} parent=51 // pred_fallthru
        _
      // Predicated region
      $region61: #{tpu_custom_call.1} parent=51 // pred_check
        %p661 = pneg %p216
      $region62: #{tpu_custom_call.1} parent=51 // pred_check_branch
        %663 = sbr.rel (%p661) target = $region64
      $region63: #{tpu_custom_call.1} parent=51 // pred_region
        %p664 = scmp.lt.s32.totalorder %s24, 1
        %s665 = scalar_select %p664, %s24, 1
        %p666 = scmp.lt.s32.totalorder %s25, 1
        %s667 = scalar_select %p666, %s25, 1
        %s668 = smul.addr %s665, 2
        %s669 = sadd.s32 %s667, %s668
        %s670 = smul.addr %s669, 8
        %s671 = scalar_lea.vmem %s6, %s670
      $region64: #{tpu_custom_call.1} parent=51 // pred_fallthru
        _
    $region52: #{tpu_custom_call.1} parent=5 // pred_fallthru
      _
  $region6: #{tpu_custom_call.1} parent=0 // loop_footer
    %s17 = sadd.s32 1, %s13
  $region7: #{tpu_custom_call.1} parent=0 // loop_footer_branch
    %12 = sbr.rel target = $region3
  $region8: #{tpu_custom_call.1} parent=0 // loop_exit
    _

</llo_original>
